<compile_context>
chip_gen: v5e
topology: v5e:2x2
jax: 0.10.0
libtpu: 0.0.40
codegen_flags: <defaults>
</compile_context>

<pallas_src>
import jax
import jax.numpy as jnp
from jax import lax
from jax.experimental import pallas as pl
from jax.experimental.pallas import tpu as pltpu

IN_CH = 3
INIT_CH = 32
MID_CH = INIT_CH // 2
EPS = 1e-5

MAX_TILE_Q = 2048   # 2x2-block rows per grid step (= 8192 stem_1 pixels)
TILE_ALIGN = 16     # sublane alignment (safe for bf16 (16,128) tiling)
MIN_GRID_STEPS = 2  # keep >=2 steps so v7x megacore "parallel" has work


# ------------------------------ Pallas kernel --------------------------------

def _stem_fused_kernel(x_ref, wblk_ref, w2a_ref, w2b_ref, w3a_ref, w3b_ref,
                       vec_ref, s1_ref, out_ref):
    """Fused StemBlock.

    x_ref   : (tile, 4*27) bf16 — each row packs the four 3x3 im2col patches
              of one 2x2 output block of stem_1, order [p00|p01|p10|p11].
    wblk_ref: (108, 128) bf16 — block-diagonal replication of the BN-folded
              stem_1 weight, so one matmul yields all four pixels per row.
    vec_ref : (8, 128) f32 packed per-channel vectors:
              row0 = tile(stem_1 bias, 4), row1 = stem_2a bias,
              row2/3 = depthwise scale/bias, row4 = pointwise bias,
              row5 = stem_3 bias.
    s1_ref  : (tile, 128) f32 — lane-dense packed stem_1 output (returned).
    out_ref : (tile, 32)  f32 — stem_3 output (one pixel per block row).
    """
    bf16 = jnp.bfloat16
    c1 = w2a_ref.shape[0]   # stem_1 channels (32)
    cm = w2a_ref.shape[1]   # bottleneck channels (16)
    co = w3a_ref.shape[1]   # output channels (32)

    # ---- stem_1: one block-diagonal matmul gives all 4 pixels, lane-packed.
    blk = jnp.dot(x_ref[...], wblk_ref[...], preferred_element_type=jnp.float32)
    blk = jnp.maximum(blk + vec_ref[0:1, :], 0.0)
    s1_ref[...] = blk.astype(s1_ref.dtype)              # lane-dense store

    p00 = blk[:, 0 * c1:1 * c1]
    p01 = blk[:, 1 * c1:2 * c1]
    p10 = blk[:, 2 * c1:3 * c1]
    p11 = blk[:, 3 * c1:4 * c1]

    # ---- stem_2a (1x1 conv+BN+ReLU), only at the stride-2 pixel (p00).
    s2a = jnp.dot(p00.astype(bf16), w2a_ref[...],
                  preferred_element_type=jnp.float32)
    s2a = jnp.maximum(s2a + vec_ref[1:2, :cm], 0.0)

    # ---- stem_2b depthwise 1x1 stride-2 conv + BN + ReLU == per-ch affine.
    t = jnp.maximum(s2a * vec_ref[2:3, :cm] + vec_ref[3:4, :cm], 0.0)

    # ---- stem_2b pointwise 1x1 conv + BN + ReLU.
    s2b = jnp.dot(t.astype(bf16), w2b_ref[...],
                  preferred_element_type=jnp.float32)
    s2b = jnp.maximum(s2b + vec_ref[4:5, :c1], 0.0)

    # ---- stem_2p: 2x2 stride-2 maxpool of stem_1 from the resident block.
    s2p = jnp.maximum(jnp.maximum(p00, p01), jnp.maximum(p10, p11))

    # ---- stem_3: 1x1 conv on concat(s2b, s2p) == split-weight accumulation.
    y = jnp.dot(s2b.astype(bf16), w3a_ref[...],
                preferred_element_type=jnp.float32)
    y = y + jnp.dot(s2p.astype(bf16), w3b_ref[...],
                    preferred_element_type=jnp.float32)
    out_ref[...] = jnp.maximum(y + vec_ref[5:6, :co], 0.0).astype(out_ref.dtype)


# ------------------------------- wrapper --------------------------------------

def _round_up(x, m):
    return (x + m - 1) // m * m


def _cdiv(a, b):
    return (a + b - 1) // b


def _pick_tiling(mq, max_tile=MAX_TILE_Q, min_steps=MIN_GRID_STEPS,
                 align=TILE_ALIGN):
    """Balanced, aligned block-row tile; avoids padding up to huge multiples."""
    steps = max(min_steps, _cdiv(mq, max_tile))
    tile = min(_round_up(_cdiv(mq, steps), align), _round_up(mq, align))
    grid = _cdiv(mq, tile)
    return grid * tile, tile, grid


def _bcast_spec(shape):
    return pl.BlockSpec(shape, lambda i: (0,) * len(shape))


def stem_fused(patches, wblk, w2a, w2b, w3a, w3b, vec):
    """patches: (Mq, 4*27) bf16 block-packed im2col rows."""
    mq, k4 = patches.shape
    c1 = w2a.shape[0]
    co = w3a.shape[1]
    mq_pad, tile, grid = _pick_tiling(mq)
    if mq_pad != mq:
        patches = jnp.pad(patches, ((0, mq_pad - mq), (0, 0)))

    s1_p, out = pl.pallas_call(
        _stem_fused_kernel,
        out_shape=(jax.ShapeDtypeStruct((mq_pad, 4 * c1), jnp.float32),
                   jax.ShapeDtypeStruct((mq_pad, co), jnp.float32)),
        grid=(grid,),
        in_specs=[
            pl.BlockSpec((tile, k4), lambda i: (i, 0)),
            _bcast_spec(wblk.shape),
            _bcast_spec(w2a.shape),
            _bcast_spec(w2b.shape),
            _bcast_spec(w3a.shape),
            _bcast_spec(w3b.shape),
            _bcast_spec(vec.shape),
        ],
        out_specs=(pl.BlockSpec((tile, 4 * c1), lambda i: (i, 0)),
                   pl.BlockSpec((tile, co), lambda i: (i, 0))),
        compiler_params=pltpu.CompilerParams(
            dimension_semantics=("parallel",)),
    )(patches, wblk, w2a, w2b, w3a, w3b, vec)

    if mq_pad != mq:
        s1_p, out = s1_p[:mq], out[:mq]
    return s1_p, out


# ----------------------------- glue helpers -----------------------------------

def fold_bn(p):
    s = p['gamma'] / jnp.sqrt(p['var'] + EPS)
    return s, p['beta'] - p['mean'] * s


def weight_to_matrix(w_oihw):
    """(Cout, Cin, Kh, Kw) -> (Kh*Kw*Cin, Cout), tap-major / Cin-minor."""
    cout, cin, kh, kw = w_oihw.shape
    return jnp.transpose(w_oihw, (2, 3, 1, 0)).reshape(kh * kw * cin, cout)


def extract_patches_blocked(x_nhwc):
    """im2col for the 3x3/stride-2/pad-1 stem_1 conv, already grouped by
    2x2 output block: returns (n*hq*wq, 4*9*c) where each row packs the four
    patches [p00|p01|p10|p11] of one block (each tap-major / channel-minor).
    Built from stride-4 slices only — no transpose is ever materialized."""
    n, h, w, c = x_nhwc.shape
    ho = (h + 2 - 3) // 2 + 1
    wo = (w + 2 - 3) // 2 + 1
    assert ho % 2 == 0 and wo % 2 == 0, \
        "StemBlock requires even H/W after stem_1 (as does the PyTorch module)"
    hq, wq = ho // 2, wo // 2
    xp = jnp.pad(x_nhwc, ((0, 0), (1, 1), (1, 1), (0, 0)))
    taps = []
    for a in range(2):              # output-row parity inside the 2x2 block
        for b in range(2):          # output-col parity inside the 2x2 block
            for dy in range(3):
                for dx in range(3):
                    y0 = 2 * a + dy
                    x0 = 2 * b + dx
                    taps.append(xp[:, y0: y0 + 4 * (hq - 1) + 1: 4,
                                      x0: x0 + 4 * (wq - 1) + 1: 4, :])
    pat = jnp.stack(taps, axis=3)                       # (n, hq, wq, 36, c)
    return pat.reshape(n * hq * wq, 36 * c), hq, wq


# ------------------------------ forward pass -----------------------------------

def stem_block_forward(x_nchw, params):
    x = jnp.transpose(x_nchw, (0, 2, 3, 1))  # NCHW -> NHWC
    n = x.shape[0]

    # ---- im2col in 2x2-block order, cast activations to bf16 (HBM traffic).
    patches, hq, wq = extract_patches_blocked(x)
    patches = patches.astype(jnp.bfloat16)               # (Mq, 108)

    # ---- fold BN (inference mode) into weights / biases.
    s1s, s1b = fold_bn(params['stem1'])
    w1 = weight_to_matrix(params['stem1']['w']) * s1s[None, :]           # (27,32)
    wblk = jnp.kron(jnp.eye(4, dtype=w1.dtype), w1).astype(jnp.bfloat16)  # (108,128)

    s2a_s, s2a_b = fold_bn(params['stem2a'])
    w2a = (weight_to_matrix(params['stem2a']['w']) * s2a_s[None, :]
           ).astype(jnp.bfloat16)                                        # (32,16)
    dw_bn_s, dw_b = fold_bn(params['stem2b_dw'])
    dw_s = params['stem2b_dw']['w'].reshape(-1) * dw_bn_s                # (16,)
    pw_s, pw_b = fold_bn(params['stem2b_pw'])
    w2b = (weight_to_matrix(params['stem2b_pw']['w']) * pw_s[None, :]
           ).astype(jnp.bfloat16)                                        # (16,32)
    s3_s, s3_b = fold_bn(params['stem3'])
    w3 = weight_to_matrix(params['stem3']['w']) * s3_s[None, :]          # (64,32)
    w3a = w3[:INIT_CH].astype(jnp.bfloat16)   # s2b half of the concat
    w3b = w3[INIT_CH:].astype(jnp.bfloat16)   # s2p half of the concat

    # ---- pack all per-channel scale/bias vectors into one (8, 128) operand.
    vec = jnp.zeros((8, 4 * INIT_CH), jnp.float32)
    vec = vec.at[0, :].set(jnp.tile(s1b, 4))
    vec = vec.at[1, :MID_CH].set(s2a_b)
    vec = vec.at[2, :MID_CH].set(dw_s)
    vec = vec.at[3, :MID_CH].set(dw_b)
    vec = vec.at[4, :INIT_CH].set(pw_b)
    vec = vec.at[5, :INIT_CH].set(s3_b)

    # ---- single fused Pallas kernel.
    s1_packed, out_flat = stem_fused(patches, wblk, w2a, w2b, w3a, w3b, vec)

    # ---- unpack to the module's NCHW return convention.
    s1 = (s1_packed.reshape(n, hq, wq, 2, 2, INIT_CH)
          .transpose(0, 5, 1, 3, 2, 4)
          .reshape(n, INIT_CH, 2 * hq, 2 * wq))
    out = out_flat.reshape(n, hq, wq, INIT_CH).transpose(0, 3, 1, 2)
    return out, s1


# --------------------------- params & reference --------------------------------

def init_params(key):
    ks = jax.random.split(key, 10)

    def conv_w(k, cout, cin, kh, kw):
        return 0.1 * jax.random.normal(k, (cout, cin, kh, kw), jnp.float32)

    def bn(k, c):
        k1, k2, k3, k4 = jax.random.split(k, 4)
        return dict(
            gamma=1.0 + 0.1 * jax.random.normal(k1, (c,), jnp.float32),
            beta=0.1 * jax.random.normal(k2, (c,), jnp.float32),
            mean=0.05 * jax.random.normal(k3, (c,), jnp.float32),
            var=0.5 + jax.random.uniform(k4, (c,), jnp.float32),
        )

    return {
        'stem1':     dict(w=conv_w(ks[0], INIT_CH, IN_CH, 3, 3), **bn(ks[1], INIT_CH)),
        'stem2a':    dict(w=conv_w(ks[2], MID_CH, INIT_CH, 1, 1), **bn(ks[3], MID_CH)),
        'stem2b_dw': dict(w=conv_w(ks[4], MID_CH, 1, 1, 1),       **bn(ks[5], MID_CH)),
        'stem2b_pw': dict(w=conv_w(ks[6], INIT_CH, MID_CH, 1, 1), **bn(ks[7], INIT_CH)),
        'stem3':     dict(w=conv_w(ks[8], INIT_CH, 2 * INIT_CH, 1, 1), **bn(ks[9], INIT_CH)),
    }


def ref_forward(x_nchw, params):
    """Pure-JAX (lax) f32 reference of the same inference-mode StemBlock."""
    x = jnp.transpose(x_nchw, (0, 2, 3, 1))

    def cbr(inp, p, stride, pad, groups=1):
        dn = lax.conv_dimension_numbers(inp.shape, p['w'].shape,
                                        ('NHWC', 'OIHW', 'NHWC'))
        y = lax.conv_general_dilated(inp, p['w'], (stride, stride),
                                     ((pad, pad), (pad, pad)),
                                     dimension_numbers=dn,
                                     feature_group_count=groups)
        s, b = fold_bn(p)
        return jnp.maximum(y * s + b, 0.0)

    s1 = cbr(x, params['stem1'], 2, 1)
    s2a = cbr(s1, params['stem2a'], 1, 0)
    dw = cbr(s2a, params['stem2b_dw'], 2, 0, groups=MID_CH)
    s2b = cbr(dw, params['stem2b_pw'], 1, 0)
    s2p = lax.reduce_window(s1, -jnp.inf, lax.max,
                            (1, 2, 2, 1), (1, 2, 2, 1), 'VALID')
    cat = jnp.concatenate([s2b, s2p], axis=-1)
    out = cbr(cat, params['stem3'], 1, 0)
    return jnp.transpose(out, (0, 3, 1, 2)), jnp.transpose(s1, (0, 3, 1, 2))


# ---------------------------------- main ----------------------------------------

if __name__ == "__main__":
    key = jax.random.PRNGKey(0)
    kx, kp = jax.random.split(key)
    x = jax.random.normal(kx, (2, IN_CH, 16, 16), jnp.float32)
    params = init_params(kp)

    fwd = jax.jit(stem_block_forward)
    out, stem1 = jax.block_until_ready(fwd(x, params))

    assert out.shape == (2, INIT_CH, 4, 4), out.shape
    assert stem1.shape == (2, INIT_CH, 8, 8), stem1.shape

    ref_out, ref_stem1 = ref_forward(x, params)
    assert jnp.allclose(stem1, ref_stem1, atol=1e-2, rtol=1e-2), \
        float(jnp.max(jnp.abs(stem1 - ref_stem1)))
    assert jnp.allclose(out, ref_out, atol=1e-2, rtol=1e-2), \
        float(jnp.max(jnp.abs(out - ref_out)))

    print("KERNEL_OK")
</pallas_src>

<mosaic_0001>
module attributes {stable_mosaic.version = 11 : i64} {
  func.func @_stem_fused_kernel(%arg0: i32, %arg1: memref<16x108xbf16, #tpu.memory_space<vmem>>, %arg2: memref<108x128xbf16, #tpu.memory_space<vmem>>, %arg3: memref<32x16xbf16, #tpu.memory_space<vmem>>, %arg4: memref<16x32xbf16, #tpu.memory_space<vmem>>, %arg5: memref<32x32xbf16, #tpu.memory_space<vmem>>, %arg6: memref<32x32xbf16, #tpu.memory_space<vmem>>, %arg7: memref<8x128xf32, #tpu.memory_space<vmem>>, %arg8: memref<16x128xf32, #tpu.memory_space<vmem>>, %arg9: memref<16x32xf32, #tpu.memory_space<vmem>>) attributes {dimension_semantics = [#tpu.dimension_semantics<parallel>], iteration_bounds = array<i64: 2>, scalar_prefetch = 0 : i64, scratch_operands = 0 : i64, tpu.core_type = #tpu.core_type<tc>, window_params = [{transform_indices = @transform_0, window_bounds = array<i64: 16, 108>}, {pipeline_mode = #tpu.pipeline_mode<synchronous>, transform_indices = @transform_1, window_bounds = array<i64: 108, 128>}, {pipeline_mode = #tpu.pipeline_mode<synchronous>, transform_indices = @transform_2, window_bounds = array<i64: 32, 16>}, {pipeline_mode = #tpu.pipeline_mode<synchronous>, transform_indices = @transform_3, window_bounds = array<i64: 16, 32>}, {pipeline_mode = #tpu.pipeline_mode<synchronous>, transform_indices = @transform_4, window_bounds = array<i64: 32, 32>}, {pipeline_mode = #tpu.pipeline_mode<synchronous>, transform_indices = @transform_5, window_bounds = array<i64: 32, 32>}, {pipeline_mode = #tpu.pipeline_mode<synchronous>, transform_indices = @transform_6, window_bounds = array<i64: 8, 128>}, {transform_indices = @transform_7, window_bounds = array<i64: 16, 128>}, {transform_indices = @transform_8, window_bounds = array<i64: 16, 32>}]} {
    %c0 = arith.constant 0 : index
    %c0_0 = arith.constant 0 : index
    %0 = vector.load %arg1[%c0, %c0_0] : memref<16x108xbf16, #tpu.memory_space<vmem>>, vector<16x108xbf16>
    %c0_1 = arith.constant 0 : index
    %c0_2 = arith.constant 0 : index
    %1 = vector.load %arg2[%c0_1, %c0_2] : memref<108x128xbf16, #tpu.memory_space<vmem>>, vector<108x128xbf16>
    %cst = arith.constant dense<0.000000e+00> : vector<16x128xf32>
    %2 = tpu.matmul %0, %1, %cst {dimension_numbers = #tpu.dot_dimension_numbers<[1], [0], [0], [1], [0, 0, 1, 1], [], []>} : vector<16x108xbf16>, vector<108x128xbf16>, vector<16x128xf32> -> vector<16x128xf32>
    %c0_3 = arith.constant 0 : index
    %c0_4 = arith.constant 0 : index
    %3 = vector.load %arg7[%c0_3, %c0_4] : memref<8x128xf32, #tpu.memory_space<vmem>>, vector<1x128xf32>
    %4 = vector.broadcast %3 : vector<1x128xf32> to vector<16x128xf32>
    %5 = arith.addf %2, %4 : vector<16x128xf32>
    %cst_5 = arith.constant 0.000000e+00 : f32
    %6 = vector.broadcast %cst_5 : f32 to vector<16x128xf32>
    %7 = arith.maximumf %5, %6 : vector<16x128xf32>
    %c0_6 = arith.constant 0 : index
    %c0_7 = arith.constant 0 : index
    %8 = vector.load %arg8[%c0_6, %c0_7] : memref<16x128xf32, #tpu.memory_space<vmem>>, vector<16x128xf32>
    tpu.vector_store %arg8[%c0_6, %c0_7], %7 {strides = array<i32>} : memref<16x128xf32, #tpu.memory_space<vmem>>, vector<16x128xf32>,
    %9 = vector.extract_strided_slice %7 {offsets = [0, 0], sizes = [16, 32], strides = [1, 1]} : vector<16x128xf32> to vector<16x32xf32>
    %10 = vector.extract_strided_slice %7 {offsets = [0, 32], sizes = [16, 32], strides = [1, 1]} : vector<16x128xf32> to vector<16x32xf32>
    %11 = vector.extract_strided_slice %7 {offsets = [0, 64], sizes = [16, 32], strides = [1, 1]} : vector<16x128xf32> to vector<16x32xf32>
    %12 = vector.extract_strided_slice %7 {offsets = [0, 96], sizes = [16, 32], strides = [1, 1]} : vector<16x128xf32> to vector<16x32xf32>
    %13 = arith.truncf %9 : vector<16x32xf32> to vector<16x32xbf16>
    %c0_8 = arith.constant 0 : index
    %c0_9 = arith.constant 0 : index
    %14 = vector.load %arg3[%c0_8, %c0_9] : memref<32x16xbf16, #tpu.memory_space<vmem>>, vector<32x16xbf16>
    %cst_10 = arith.constant dense<0.000000e+00> : vector<16x16xf32>
    %15 = tpu.matmul %13, %14, %cst_10 {dimension_numbers = #tpu.dot_dimension_numbers<[1], [0], [0], [1], [0, 0, 1, 1], [], []>} : vector<16x32xbf16>, vector<32x16xbf16>, vector<16x16xf32> -> vector<16x16xf32>
    %c1 = arith.constant 1 : index
    %c0_11 = arith.constant 0 : index
    %16 = vector.load %arg7[%c1, %c0_11] : memref<8x128xf32, #tpu.memory_space<vmem>>, vector<1x16xf32>
    %17 = vector.broadcast %16 : vector<1x16xf32> to vector<16x16xf32>
    %18 = arith.addf %15, %17 : vector<16x16xf32>
    %cst_12 = arith.constant 0.000000e+00 : f32
    %19 = vector.broadcast %cst_12 : f32 to vector<16x16xf32>
    %20 = arith.maximumf %18, %19 : vector<16x16xf32>
    %c2 = arith.constant 2 : index
    %c0_13 = arith.constant 0 : index
    %21 = vector.load %arg7[%c2, %c0_13] : memref<8x128xf32, #tpu.memory_space<vmem>>, vector<1x16xf32>
    %22 = vector.broadcast %21 : vector<1x16xf32> to vector<16x16xf32>
    %23 = arith.mulf %20, %22 : vector<16x16xf32>
    %c3 = arith.constant 3 : index
    %c0_14 = arith.constant 0 : index
    %24 = vector.load %arg7[%c3, %c0_14] : memref<8x128xf32, #tpu.memory_space<vmem>>, vector<1x16xf32>
    %25 = vector.broadcast %24 : vector<1x16xf32> to vector<16x16xf32>
    %26 = arith.addf %23, %25 : vector<16x16xf32>
    %cst_15 = arith.constant 0.000000e+00 : f32
    %27 = vector.broadcast %cst_15 : f32 to vector<16x16xf32>
    %28 = arith.maximumf %26, %27 : vector<16x16xf32>
    %29 = arith.truncf %28 : vector<16x16xf32> to vector<16x16xbf16>
    %c0_16 = arith.constant 0 : index
    %c0_17 = arith.constant 0 : index
    %30 = vector.load %arg4[%c0_16, %c0_17] : memref<16x32xbf16, #tpu.memory_space<vmem>>, vector<16x32xbf16>
    %cst_18 = arith.constant dense<0.000000e+00> : vector<16x32xf32>
    %31 = tpu.matmul %29, %30, %cst_18 {dimension_numbers = #tpu.dot_dimension_numbers<[1], [0], [0], [1], [0, 0, 1, 1], [], []>} : vector<16x16xbf16>, vector<16x32xbf16>, vector<16x32xf32> -> vector<16x32xf32>
    %c4 = arith.constant 4 : index
    %c0_19 = arith.constant 0 : index
    %32 = vector.load %arg7[%c4, %c0_19] : memref<8x128xf32, #tpu.memory_space<vmem>>, vector<1x32xf32>
    %33 = vector.broadcast %32 : vector<1x32xf32> to vector<16x32xf32>
    %34 = arith.addf %31, %33 : vector<16x32xf32>
    %cst_20 = arith.constant 0.000000e+00 : f32
    %35 = vector.broadcast %cst_20 : f32 to vector<16x32xf32>
    %36 = arith.maximumf %34, %35 : vector<16x32xf32>
    %37 = arith.maximumf %9, %10 : vector<16x32xf32>
    %38 = arith.maximumf %11, %12 : vector<16x32xf32>
    %39 = arith.maximumf %37, %38 : vector<16x32xf32>
    %40 = arith.truncf %36 : vector<16x32xf32> to vector<16x32xbf16>
    %c0_21 = arith.constant 0 : index
    %c0_22 = arith.constant 0 : index
    %41 = vector.load %arg5[%c0_21, %c0_22] : memref<32x32xbf16, #tpu.memory_space<vmem>>, vector<32x32xbf16>
    %cst_23 = arith.constant dense<0.000000e+00> : vector<16x32xf32>
    %42 = tpu.matmul %40, %41, %cst_23 {dimension_numbers = #tpu.dot_dimension_numbers<[1], [0], [0], [1], [0, 0, 1, 1], [], []>} : vector<16x32xbf16>, vector<32x32xbf16>, vector<16x32xf32> -> vector<16x32xf32>
    %43 = arith.truncf %39 : vector<16x32xf32> to vector<16x32xbf16>
    %c0_24 = arith.constant 0 : index
    %c0_25 = arith.constant 0 : index
    %44 = vector.load %arg6[%c0_24, %c0_25] : memref<32x32xbf16, #tpu.memory_space<vmem>>, vector<32x32xbf16>
    %cst_26 = arith.constant dense<0.000000e+00> : vector<16x32xf32>
    %45 = tpu.matmul %43, %44, %cst_26 {dimension_numbers = #tpu.dot_dimension_numbers<[1], [0], [0], [1], [0, 0, 1, 1], [], []>} : vector<16x32xbf16>, vector<32x32xbf16>, vector<16x32xf32> -> vector<16x32xf32>
    %46 = arith.addf %42, %45 : vector<16x32xf32>
    %c5 = arith.constant 5 : index
    %c0_27 = arith.constant 0 : index
    %47 = vector.load %arg7[%c5, %c0_27] : memref<8x128xf32, #tpu.memory_space<vmem>>, vector<1x32xf32>
    %48 = vector.broadcast %47 : vector<1x32xf32> to vector<16x32xf32>
    %49 = arith.addf %46, %48 : vector<16x32xf32>
    %cst_28 = arith.constant 0.000000e+00 : f32
    %50 = vector.broadcast %cst_28 : f32 to vector<16x32xf32>
    %51 = arith.maximumf %49, %50 : vector<16x32xf32>
    %c0_29 = arith.constant 0 : index
    %c0_30 = arith.constant 0 : index
    %52 = vector.load %arg9[%c0_29, %c0_30] : memref<16x32xf32, #tpu.memory_space<vmem>>, vector<16x32xf32>
    tpu.vector_store %arg9[%c0_29, %c0_30], %51 {strides = array<i32>} : memref<16x32xf32, #tpu.memory_space<vmem>>, vector<16x32xf32>,
    return
  }
  func.func @transform_0(%arg0: i32) -> (i32, i32) {
    %c0_i32 = arith.constant 0 : i32
    %c0_i32_0 = arith.constant 0 : i32
    return %arg0, %c0_i32 : i32, i32
  }
  func.func @transform_1(%arg0: i32) -> (i32, i32) {
    %c0_i32 = arith.constant 0 : i32
    %c0_i32_0 = arith.constant 0 : i32
    %c0_i32_1 = arith.constant 0 : i32
    return %c0_i32, %c0_i32_0 : i32, i32
  }
  func.func @transform_2(%arg0: i32) -> (i32, i32) {
    %c0_i32 = arith.constant 0 : i32
    %c0_i32_0 = arith.constant 0 : i32
    %c0_i32_1 = arith.constant 0 : i32
    return %c0_i32, %c0_i32_0 : i32, i32
  }
  func.func @transform_3(%arg0: i32) -> (i32, i32) {
    %c0_i32 = arith.constant 0 : i32
    %c0_i32_0 = arith.constant 0 : i32
    %c0_i32_1 = arith.constant 0 : i32
    return %c0_i32, %c0_i32_0 : i32, i32
  }
  func.func @transform_4(%arg0: i32) -> (i32, i32) {
    %c0_i32 = arith.constant 0 : i32
    %c0_i32_0 = arith.constant 0 : i32
    %c0_i32_1 = arith.constant 0 : i32
    return %c0_i32, %c0_i32_0 : i32, i32
  }
  func.func @transform_5(%arg0: i32) -> (i32, i32) {
    %c0_i32 = arith.constant 0 : i32
    %c0_i32_0 = arith.constant 0 : i32
    %c0_i32_1 = arith.constant 0 : i32
    return %c0_i32, %c0_i32_0 : i32, i32
  }
  func.func @transform_6(%arg0: i32) -> (i32, i32) {
    %c0_i32 = arith.constant 0 : i32
    %c0_i32_0 = arith.constant 0 : i32
    %c0_i32_1 = arith.constant 0 : i32
    return %c0_i32, %c0_i32_0 : i32, i32
  }
  func.func @transform_7(%arg0: i32) -> (i32, i32) {
    %c0_i32 = arith.constant 0 : i32
    %c0_i32_0 = arith.constant 0 : i32
    return %arg0, %c0_i32 : i32, i32
  }
  func.func @transform_8(%arg0: i32) -> (i32, i32) {
    %c0_i32 = arith.constant 0 : i32
    %c0_i32_0 = arith.constant 0 : i32
    return %arg0, %c0_i32 : i32, i32
  }
}

</mosaic_0001>

<llo_original>
// kernel: tile.8
$region0: #{tile.8}
  #allocation0 [shape = 's32[1]{0}', space=sflag, size = 0x4, scoped, tag = 'scoped memory for tile.8']
  %s0 = inlined_call_operand.vmem [shape: f32[32], index: 0, kind: input, shape index: {}]
  %s1 = inlined_call_operand.vmem [shape: f32[4,32], index: 1, kind: output, shape index: {}]
  // Predicated region
  $region2: #{tile.8} parent=0 // pred_check
    _
  $region3: #{tile.8} parent=0 // pred_check_branch
    %3 = sbr.rel (0) target = $region5
  $region4: #{tile.8} parent=0 // pred_region
    _
  $region5: #{tile.8} parent=0 // pred_fallthru
    _
  %v4 = vld [vmem:[%s0] ss:$0 sm:$0xff]
  %5 = vst [vmem:[%s1] sm:$0xf] %v4

// kernel: stem_block_forward.1
$region0: #{stem_block_forward.1}
  #allocation0 [shape = 'u32[]', space=smem, size = 0x4, offset = 0x4, fixed_abs, tag = 'smem constant byte address 0x4 - core index']
  #allocation1 [shape = 'u32[72,128]{1,0:T(1,128)}', space=vmem, size = 0x9000, scoped, tag = 'internal scratch']
  %s0 = inlined_call_operand.vmem [shape: bf16[32,108], index: 0, kind: input, shape index: {}]
  %s1 = inlined_call_operand.vmem [shape: bf16[108,128], index: 1, kind: input, shape index: {}]
  %s2 = inlined_call_operand.vmem [shape: bf16[32,16], index: 2, kind: input, shape index: {}]
  %s3 = inlined_call_operand.vmem [shape: bf16[16,32], index: 3, kind: input, shape index: {}]
  %s4 = inlined_call_operand.vmem [shape: bf16[32,32], index: 4, kind: input, shape index: {}]
  %s5 = inlined_call_operand.vmem [shape: bf16[32,32], index: 5, kind: input, shape index: {}]
  %s6 = inlined_call_operand.vmem [shape: f32[8,128], index: 6, kind: input, shape index: {}]
  %s7 = inlined_call_operand.vmem [shape: f32[32,128], index: 7, kind: output, shape index: {0}]
  %s8 = inlined_call_operand.hbm [shape: f32[32,32], index: 8, kind: output, shape index: {1}]
  %9 = xla_tuple %s7, %s8
  %s10 = sld [smem:[#allocation0]]
  $region69: #{stem_block_forward.1} parent=0
    _
  %s12 = ssub.s32 1, %s10
  %s13 = scalar_select 0, %s12, %s10
  $region1: #{stem_block_forward.1} parent=0
    #allocation2 [shape = 'u8[16384]{0}', space=vmem, size = 0x4000, scoped, tag = 'output window, operand 1']
    #allocation3 [shape = 's32[2]{0}', space=sflag, size = 0x8, scoped, tag = 'scoped memory for stem_block_forward.1']
    %14 = vsyncpa [#allocation3], 0
    %s15 = scalar_lea.sflag [#allocation3], 1
    %16 = vsyncpa %s15, 0
    loop: start=0, step=1, limit=4
    $region2: #{stem_block_forward.1} parent=1 // loop_pre_header
      _
    $region3: #{stem_block_forward.1} parent=1 // loop_header
      %s18 = sphi 0, %s22
      %p19 = scmp.ge.s32.totalorder %s18, 4
      %s28 = sphi 0, %s30
      %s31 = sphi 0, %s28
      %s32 = sphi 0, %s31
      %s48 = sphi 0, %s32
      %s52 = sphi 0, %s52
      %s54 = sphi 0, %s52
      %s55 = sphi 0, %s54
      %s69 = sphi 0, %s55
      %s73 = sphi 0, %s73
      %s75 = sphi 0, %s73
      %s76 = sphi 0, %s75
      %s90 = sphi 0, %s76
      %s94 = sphi 0, %s94
      %s96 = sphi 0, %s94
      %s97 = sphi 0, %s96
      %s111 = sphi 0, %s97
      %s115 = sphi 0, %s115
      %s117 = sphi 0, %s115
      %s118 = sphi 0, %s117
      %s132 = sphi 0, %s118
      %s136 = sphi 0, %s136
      %s138 = sphi 0, %s136
      %s139 = sphi 0, %s138
      %s153 = sphi 0, %s139
      %s157 = sphi 0, %s157
      %s159 = sphi 0, %s157
      %s160 = sphi 0, %s159
      %s174 = sphi 0, %s160
      %s180 = sphi 0, %s182
      %s183 = sphi 0, %s180
      %s184 = sphi 0, %s183
      %s200 = sphi 0, %s184
      %s206 = sphi 0, %s208
      %s209 = sphi 0, %s206
      %s210 = sphi 0, %s209
      %s226 = sphi 0, %s210
    $region4: #{stem_block_forward.1} parent=1 // loop_header_branch
      %21 = sbr.rel (%p19) target = $region8
    $region5: #{stem_block_forward.1} parent=1 // loop_body
      %s23 = ssub.s32 %s18, 1
      %s24 = ssub.s32 %s18, 2
      %s25 = sadd.s32 %s18, 1
      %s26 = ssub.s32 %s18, %s25
      %p27 = scmp.eq.s32.totalorder %s26, 0
      %s29 = sadd.s32 %s28, 1
      %s30 = scalar_select %p27, %s28, %s29
      %p33 = pneg %p27
      %p34 = scmp.eq.s32.totalorder %s18, 1
      %p35 = por %p33, %p34
      %p36 = scmp.ne.s32.totalorder %s28, %s31
      %p37 = scmp.eq.s32.totalorder %s18, 0
      %p38 = por %p36, %p37
      %p39 = scmp.ne.s32.totalorder %s28, %s31
      %p40 = scmp.eq.s32.totalorder %s23, 1
      %p41 = por %p39, %p40
      %p42 = scmp.ne.s32.totalorder %s31, %s32
      %p43 = scmp.eq.s32.totalorder %s23, 0
      %p44 = por %p42, %p43
      %p45 = scmp.ne.s32.totalorder %s31, %s32
      %p46 = scmp.eq.s32.totalorder %s24, 1
      %p47 = por %p45, %p46
      %p49 = scmp.ne.s32.totalorder %s32, %s48
      %p50 = scmp.eq.s32.totalorder %s24, 0
      %p51 = por %p49, %p50
      %s53 = sadd.s32 %s52, 1
      %p56 = scmp.eq.s32.totalorder %s18, 1
      %p57 = scmp.ne.s32.totalorder %s52, %s54
      %p58 = scmp.eq.s32.totalorder %s18, 0
      %p59 = por %p57, %p58
      %p60 = scmp.ne.s32.totalorder %s52, %s54
      %p61 = scmp.eq.s32.totalorder %s23, 1
      %p62 = por %p60, %p61
      %p63 = scmp.ne.s32.totalorder %s54, %s55
      %p64 = scmp.eq.s32.totalorder %s23, 0
      %p65 = por %p63, %p64
      %p66 = scmp.ne.s32.totalorder %s54, %s55
      %p67 = scmp.eq.s32.totalorder %s24, 1
      %p68 = por %p66, %p67
      %p70 = scmp.ne.s32.totalorder %s55, %s69
      %p71 = scmp.eq.s32.totalorder %s24, 0
      %p72 = por %p70, %p71
      %s74 = sadd.s32 %s73, 1
      %p77 = scmp.eq.s32.totalorder %s18, 1
      %p78 = scmp.ne.s32.totalorder %s73, %s75
      %p79 = scmp.eq.s32.totalorder %s18, 0
      %p80 = por %p78, %p79
      %p81 = scmp.ne.s32.totalorder %s73, %s75
      %p82 = scmp.eq.s32.totalorder %s23, 1
      %p83 = por %p81, %p82
      %p84 = scmp.ne.s32.totalorder %s75, %s76
      %p85 = scmp.eq.s32.totalorder %s23, 0
      %p86 = por %p84, %p85
      %p87 = scmp.ne.s32.totalorder %s75, %s76
      %p88 = scmp.eq.s32.totalorder %s24, 1
      %p89 = por %p87, %p88
      %p91 = scmp.ne.s32.totalorder %s76, %s90
      %p92 = scmp.eq.s32.totalorder %s24, 0
      %p93 = por %p91, %p92
      %s95 = sadd.s32 %s94, 1
      %p98 = scmp.eq.s32.totalorder %s18, 1
      %p99 = scmp.ne.s32.totalorder %s94, %s96
      %p100 = scmp.eq.s32.totalorder %s18, 0
      %p101 = por %p99, %p100
      %p102 = scmp.ne.s32.totalorder %s94, %s96
      %p103 = scmp.eq.s32.totalorder %s23, 1
      %p104 = por %p102, %p103
      %p105 = scmp.ne.s32.totalorder %s96, %s97
      %p106 = scmp.eq.s32.totalorder %s23, 0
      %p107 = por %p105, %p106
      %p108 = scmp.ne.s32.totalorder %s96, %s97
      %p109 = scmp.eq.s32.totalorder %s24, 1
      %p110 = por %p108, %p109
      %p112 = scmp.ne.s32.totalorder %s97, %s111
      %p113 = scmp.eq.s32.totalorder %s24, 0
      %p114 = por %p112, %p113
      %s116 = sadd.s32 %s115, 1
      %p119 = scmp.eq.s32.totalorder %s18, 1
      %p120 = scmp.ne.s32.totalorder %s115, %s117
      %p121 = scmp.eq.s32.totalorder %s18, 0
      %p122 = por %p120, %p121
      %p123 = scmp.ne.s32.totalorder %s115, %s117
      %p124 = scmp.eq.s32.totalorder %s23, 1
      %p125 = por %p123, %p124
      %p126 = scmp.ne.s32.totalorder %s117, %s118
      %p127 = scmp.eq.s32.totalorder %s23, 0
      %p128 = por %p126, %p127
      %p129 = scmp.ne.s32.totalorder %s117, %s118
      %p130 = scmp.eq.s32.totalorder %s24, 1
      %p131 = por %p129, %p130
      %p133 = scmp.ne.s32.totalorder %s118, %s132
      %p134 = scmp.eq.s32.totalorder %s24, 0
      %p135 = por %p133, %p134
      %s137 = sadd.s32 %s136, 1
      %p140 = scmp.eq.s32.totalorder %s18, 1
      %p141 = scmp.ne.s32.totalorder %s136, %s138
      %p142 = scmp.eq.s32.totalorder %s18, 0
      %p143 = por %p141, %p142
      %p144 = scmp.ne.s32.totalorder %s136, %s138
      %p145 = scmp.eq.s32.totalorder %s23, 1
      %p146 = por %p144, %p145
      %p147 = scmp.ne.s32.totalorder %s138, %s139
      %p148 = scmp.eq.s32.totalorder %s23, 0
      %p149 = por %p147, %p148
      %p150 = scmp.ne.s32.totalorder %s138, %s139
      %p151 = scmp.eq.s32.totalorder %s24, 1
      %p152 = por %p150, %p151
      %p154 = scmp.ne.s32.totalorder %s139, %s153
      %p155 = scmp.eq.s32.totalorder %s24, 0
      %p156 = por %p154, %p155
      %s158 = sadd.s32 %s157, 1
      %p161 = scmp.eq.s32.totalorder %s18, 1
      %p162 = scmp.ne.s32.totalorder %s157, %s159
      %p163 = scmp.eq.s32.totalorder %s18, 0
      %p164 = por %p162, %p163
      %p165 = scmp.ne.s32.totalorder %s157, %s159
      %p166 = scmp.eq.s32.totalorder %s23, 1
      %p167 = por %p165, %p166
      %p168 = scmp.ne.s32.totalorder %s159, %s160
      %p169 = scmp.eq.s32.totalorder %s23, 0
      %p170 = por %p168, %p169
      %p171 = scmp.ne.s32.totalorder %s159, %s160
      %p172 = scmp.eq.s32.totalorder %s24, 1
      %p173 = por %p171, %p172
      %p175 = scmp.ne.s32.totalorder %s160, %s174
      %p176 = scmp.eq.s32.totalorder %s24, 0
      %p177 = por %p175, %p176
      %s178 = ssub.s32 %s18, %s25
      %p179 = scmp.eq.s32.totalorder %s178, 0
      %s181 = sadd.s32 %s180, 1
      %s182 = scalar_select %p179, %s180, %s181
      %p185 = pneg %p179
      %p186 = scmp.eq.s32.totalorder %s18, 1
      %p187 = por %p185, %p186
      %p188 = scmp.ne.s32.totalorder %s180, %s183
      %p189 = scmp.eq.s32.totalorder %s18, 0
      %p190 = por %p188, %p189
      %p191 = scmp.ne.s32.totalorder %s180, %s183
      %p192 = scmp.eq.s32.totalorder %s23, 1
      %p193 = por %p191, %p192
      %p194 = scmp.ne.s32.totalorder %s183, %s184
      %p195 = scmp.eq.s32.totalorder %s23, 0
      %p196 = por %p194, %p195
      %p197 = scmp.ne.s32.totalorder %s183, %s184
      %p198 = scmp.eq.s32.totalorder %s24, 1
      %p199 = por %p197, %p198
      %p201 = scmp.ne.s32.totalorder %s184, %s200
      %p202 = scmp.eq.s32.totalorder %s24, 0
      %p203 = por %p201, %p202
      %s204 = ssub.s32 %s18, %s25
      %p205 = scmp.eq.s32.totalorder %s204, 0
      %s207 = sadd.s32 %s206, 1
      %s208 = scalar_select %p205, %s206, %s207
      %p211 = pneg %p205
      %p212 = scmp.eq.s32.totalorder %s18, 1
      %p213 = por %p211, %p212
      %p214 = scmp.ne.s32.totalorder %s206, %s209
      %p215 = scmp.eq.s32.totalorder %s18, 0
      %p216 = por %p214, %p215
      %p217 = scmp.ne.s32.totalorder %s206, %s209
      %p218 = scmp.eq.s32.totalorder %s23, 1
      %p219 = por %p217, %p218
      %p220 = scmp.ne.s32.totalorder %s209, %s210
      %p221 = scmp.eq.s32.totalorder %s23, 0
      %p222 = por %p220, %p221
      %p223 = scmp.ne.s32.totalorder %s209, %s210
      %p224 = scmp.eq.s32.totalorder %s24, 1
      %p225 = por %p223, %p224
      %p227 = scmp.ne.s32.totalorder %s210, %s226
      %p228 = scmp.eq.s32.totalorder %s24, 0
      %p229 = por %p227, %p228
      %p230 = scmp.le.s32.totalorder 1, %s18
      %p231 = scmp.lt.s32.totalorder %s18, 3
      %p232 = pnand %p230, %p231
      %p233 = pneg %p232
      // Predicated region
      $region9: #{stem_block_forward.1} parent=5 // pred_check
        _
      $region10: #{stem_block_forward.1} parent=5 // pred_check_branch
        %235 = sbr.rel (%p232) target = $region12
      $region11: #{stem_block_forward.1} parent=5 // pred_region
        %s236 = ssub.s32 %s18, 1
        // Predicated region
        $region13: #{stem_block_forward.1} parent=11 // pred_check
          %p237 = pneg %p65
        $region14: #{stem_block_forward.1} parent=11 // pred_check_branch
          %239 = sbr.rel (%p237) target = $region16
        $region15: #{stem_block_forward.1} parent=11 // pred_region
          _
        $region16: #{stem_block_forward.1} parent=11 // pred_fallthru
          _
        // Predicated region
        $region17: #{stem_block_forward.1} parent=11 // pred_check
          %p240 = pneg %p86
        $region18: #{stem_block_forward.1} parent=11 // pred_check_branch
          %242 = sbr.rel (%p240) target = $region20
        $region19: #{stem_block_forward.1} parent=11 // pred_region
          _
        $region20: #{stem_block_forward.1} parent=11 // pred_fallthru
          _
        // Predicated region
        $region21: #{stem_block_forward.1} parent=11 // pred_check
          %p243 = pneg %p107
        $region22: #{stem_block_forward.1} parent=11 // pred_check_branch
          %245 = sbr.rel (%p243) target = $region24
        $region23: #{stem_block_forward.1} parent=11 // pred_region
          _
        $region24: #{stem_block_forward.1} parent=11 // pred_fallthru
          _
        // Predicated region
        $region25: #{stem_block_forward.1} parent=11 // pred_check
          %p246 = pneg %p128
        $region26: #{stem_block_forward.1} parent=11 // pred_check_branch
          %248 = sbr.rel (%p246) target = $region28
        $region27: #{stem_block_forward.1} parent=11 // pred_region
          _
        $region28: #{stem_block_forward.1} parent=11 // pred_fallthru
          _
        // Predicated region
        $region29: #{stem_block_forward.1} parent=11 // pred_check
          %p249 = pneg %p149
        $region30: #{stem_block_forward.1} parent=11 // pred_check_branch
          %251 = sbr.rel (%p249) target = $region32
        $region31: #{stem_block_forward.1} parent=11 // pred_region
          _
        $region32: #{stem_block_forward.1} parent=11 // pred_fallthru
          _
        // Predicated region
        $region33: #{stem_block_forward.1} parent=11 // pred_check
          %p252 = pneg %p170
        $region34: #{stem_block_forward.1} parent=11 // pred_check_branch
          %254 = sbr.rel (%p252) target = $region36
        $region35: #{stem_block_forward.1} parent=11 // pred_region
          _
        $region36: #{stem_block_forward.1} parent=11 // pred_fallthru
          _
      $region12: #{stem_block_forward.1} parent=5 // pred_fallthru
        _
      %p255 = scmp.lt.s32.totalorder %s18, 2
      // Predicated region
      $region37: #{stem_block_forward.1} parent=5 // pred_check
        %p256 = pneg %p255
      $region38: #{stem_block_forward.1} parent=5 // pred_check_branch
        %258 = sbr.rel (%p256) target = $region40
      $region39: #{stem_block_forward.1} parent=5 // pred_region
        // Predicated region
        $region41: #{stem_block_forward.1} parent=39 // pred_check
          %p259 = pneg %p38
        $region42: #{stem_block_forward.1} parent=39 // pred_check_branch
          %261 = sbr.rel (%p259) target = $region44
        $region43: #{stem_block_forward.1} parent=39 // pred_region
          %s262 = smul.u32 2, %s18
          %p263 = scmp.lt.s32.totalorder %s262, 3
          %s264 = scalar_select %p263, %s262, 3
          %s265 = smul.addr %s264, 4
          %s266 = scalar_lea.vmem %s0, %s265
          %s267 = smul.u32 2, %s18
        $region44: #{stem_block_forward.1} parent=39 // pred_fallthru
          _
      $region40: #{stem_block_forward.1} parent=5 // pred_fallthru
        _
      %p268 = scmp.le.s32.totalorder 1, %s18
      %p269 = scmp.lt.s32.totalorder %s18, 3
      %p270 = pnand %p268, %p269
      %p271 = pneg %p270
      // Predicated region
      $region45: #{stem_block_forward.1} parent=5 // pred_check
        _
      $region46: #{stem_block_forward.1} parent=5 // pred_check_branch
        %273 = sbr.rel (%p270) target = $region48
      $region47: #{stem_block_forward.1} parent=5 // pred_region
        %s274 = ssub.s32 %s18, 1
        %s275 = smul.u32 2, %s23
        %p276 = scmp.lt.s32.totalorder %s275, 3
        %s277 = scalar_select %p276, %s275, 3
        %s278 = smul.addr %s277, 4
        %s279 = scalar_lea.vmem %s0, %s278
        %p280 = pneg %p44
        %p281 = pneg %p41
        %p282 = pneg %p65
        %p283 = pneg %p62
        %p284 = pneg %p86
        %p285 = pneg %p83
        %p286 = pneg %p107
        %p287 = pneg %p104
        %p288 = pneg %p128
        %p289 = pneg %p125
        %p290 = pneg %p149
        %p291 = pneg %p146
        %p292 = pneg %p170
        %p293 = pneg %p167
        %p294 = pneg %p196
        %p295 = pneg %p193
        %s296 = smul.u32 2, %s23
        %p297 = scmp.lt.s32.totalorder %s296, 3
        %s298 = scalar_select %p297, %s296, 3
        %s299 = smul.addr %s298, 8
        %s300 = scalar_lea.vmem %s7, %s299
        %p301 = pneg %p222
        %p302 = pneg %p219
        %s303 = sand.u32 %s209, 1
        %s304 = scalar_lea.sflag [#allocation3], %s303
        %s305 = sand.u32 %s209, 1
        %s306 = smul.addr %s305, 16
        %s307 = scalar_lea.vmem [#allocation2], %s306
        %s308 = smul.u32 2, %s23
        %p309 = scmp.lt.s32.totalorder %s308, 3
        %s310 = scalar_select %p309, %s308, 3
        %s311 = smul.addr %s310, 4
        %s312 = scalar_lea.vmem %s0, %s311
        %s313 = smul.u32 2, %s23
        %s314 = smul.u32 2, %s23
        %p315 = scmp.lt.s32.totalorder %s314, 3
        %s316 = scalar_select %p315, %s314, 3
        %s317 = smul.addr %s316, 8
        %s318 = scalar_lea.vmem %s7, %s317
        %s319 = smul.u32 2, %s23
        %s320 = smul.u32 2, %s23
        %v322 = vld [vmem:[%s312] sm:$0xf]
        %v323 = vld [vmem:[%s312 + $0x4] sm:$0xf]
        %v324 = vld [vmem:[%s1] sm:$0xf]
        %v325 = vld [vmem:[%s1 + $0x4] sm:$0xf]
        %v326 = vld [vmem:[%s1 + $0x8] sm:$0xf]
        %v327 = vld [vmem:[%s1 + $0xc] sm:$0xf]
        %v328 = vld [vmem:[%s1 + $0x10] sm:$0xf]
        %v329 = vld [vmem:[%s1 + $0x14] sm:$0xf]
        %v330 = vld [vmem:[%s1 + $0x18] sm:$0xf]
        %v331 = vld [vmem:[%s1 + $0x1c] sm:$0xf]
        %v332 = vld [vmem:[%s1 + $0x20] sm:$0xf]
        %v333 = vld [vmem:[%s1 + $0x24] sm:$0xf]
        %v334 = vld [vmem:[%s1 + $0x28] sm:$0xf]
        %v335 = vld [vmem:[%s1 + $0x2c] sm:$0xf]
        %v336 = vld [vmem:[%s1 + $0x30] sm:$0xf]
        %v337 = vld [vmem:[%s1 + $0x34] sm:$0x3]
        %v338 = vld [vmem:[%s6] sm:$0x1]
        %v339 = vperm.slane %v338, 0
        %v342 = vunpack.c.l.b16 %v322
        %v343 = vunpack.c.l.b16 %v323
        %v344 = vpack.c.b16 %v343, %v342
        %v359 = vunpack.c.l.b16 %v324
        %v360 = vunpack.c.l.b16 %v325
        %v361 = vunpack.c.l.b16 %v326
        %v362 = vunpack.c.l.b16 %v327
        %v363 = vunpack.c.l.b16 %v328
        %v364 = vunpack.c.l.b16 %v329
        %v365 = vunpack.c.l.b16 %v330
        %v366 = vunpack.c.l.b16 %v331
        %v367 = vunpack.c.l.b16 %v332
        %v368 = vunpack.c.l.b16 %v333
        %v369 = vunpack.c.l.b16 %v334
        %v370 = vunpack.c.l.b16 %v335
        %v371 = vunpack.c.l.b16 %v336
        %v372 = vunpack.c.l.b16 %v337
        %v373 = vpack.c.b16 %v360, %v359
        %v374 = vpack.c.b16 %v362, %v361
        %v375 = vpack.c.b16 %v364, %v363
        %v376 = vpack.c.b16 %v366, %v365
        %v377 = vpack.c.b16 %v368, %v367
        %v378 = vpack.c.b16 %v370, %v369
        %v379 = vpack.c.b16 %v372, %v371
        %vm386 = vcmask 883712
        %v388 = vsel %vm386, %v344, 0
        %vm390 = vcmask 1045504
        %v392 = vsel %vm390, %v379, 0
        %394 = vmatpush.bf16.msra.mxu0 0
        %395 = vmatpush.bf16.msra.mxu0 %v392
        %396 = vmatpush.bf16.msra.mxu0 %v378
        %397 = vmatpush.bf16.msra.mxu0 %v377
        %398 = vmatpush.bf16.msra.mxu0 %v376
        %399 = vmatpush.bf16.msra.mxu0 %v375
        %400 = vmatpush.bf16.msra.mxu0 %v374
        %401 = vmatpush.bf16.msra.mxu0 %v373
        %402 = vmatmul.bf16.gmra.mxu0 %v388
        %v403 = vpop.f32.mrf.mxu0
        %v404 = vadd.f32 %v339, %v403
        %v405 = vpop.f32.mrf.mxu0
        %v406 = vadd.f32 %v339, %v405
        %407 = vdwg.mxu0
        %v408 = vmax.f32 %v404, 0.0
        %v409 = vmax.f32 %v406, 0.0
        %410 = vst [vmem:[%s318] sm:$0xff] %v408
        %411 = vst [vmem:[%s318 + $0x8] sm:$0xff] %v409
        %v412 = vpack.c.bf16 %v409, %v408
        %v413 = vld [vmem:[%s2] sm:$0xf]
        %v414 = vld [vmem:[%s2 + $0x4] sm:$0xf]
        %v415 = vld [vmem:[%s2 + $0x8] sm:$0xf]
        %v416 = vld [vmem:[%s2 + $0xc] sm:$0xf]
        %v417 = vld [vmem:[%s6 + $0x1] sm:$0x1]
        %v418 = vperm.slane %v417, 0
        %v423 = vunpack.c.l.b16 %v413
        %v424 = vunpack.c.l.b16 %v414
        %v425 = vunpack.c.l.b16 %v415
        %v426 = vunpack.c.l.b16 %v416
        %v427 = vpack.c.b16 %v424, %v423
        %v428 = vpack.c.b16 %v426, %v425
        %vm431 = vcmask 261120
        %v433 = vsel %vm431, %v412, 0
        %435 = vmatpush.bf16.msra.mxu0 0
        %436 = vmatpush.bf16.msra.mxu0 0
        %437 = vmatpush.bf16.msra.mxu0 0
        %438 = vmatpush.bf16.msra.mxu0 0
        %439 = vmatpush.bf16.msra.mxu0 0
        %440 = vmatpush.bf16.msra.mxu0 0
        %441 = vmatpush.bf16.msra.mxu0 %v428
        %442 = vmatpush.bf16.msra.mxu0 %v427
        %443 = vmatmul.bf16.gmra.mxu0 %v433
        %v444 = vpop.f32.mrf.mxu0
        %v445 = vadd.f32 %v418, %v444
        %v446 = vpop.f32.mrf.mxu0
        %v447 = vadd.f32 %v418, %v446
        %448 = vdwg.mxu0
        %v449 = vmax.f32 %v445, 0.0
        %v450 = vmax.f32 %v447, 0.0
        %v451 = vld [vmem:[%s6 + $0x2] sm:$0x1]
        %v452 = vperm.slane %v451, 0
        %v453 = vmul.f32 %v449, %v452
        %v454 = vmul.f32 %v450, %v452
        %v455 = vld [vmem:[%s6 + $0x3] sm:$0x1]
        %v456 = vperm.slane %v455, 0
        %v457 = vadd.f32 %v453, %v456
        %v458 = vadd.f32 %v454, %v456
        %v459 = vmax.f32 %v457, 0.0
        %v460 = vmax.f32 %v458, 0.0
        %v461 = vpack.c.bf16 %v460, %v459
        %v462 = vld [vmem:[%s3] sm:$0xf]
        %v463 = vld [vmem:[%s3 + $0x4] sm:$0xf]
        %v464 = vld [vmem:[%s6 + $0x4] sm:$0x1]
        %v465 = vperm.slane %v464, 0
        %v468 = vunpack.c.l.b16 %v462
        %v469 = vunpack.c.l.b16 %v463
        %v470 = vpack.c.b16 %v469, %v468
        %vm472 = vcmask 130048
        %v474 = vsel %vm472, %v461, 0
        %476 = vmatpush.bf16.msra.mxu0 0
        %477 = vmatpush.bf16.msra.mxu0 0
        %478 = vmatpush.bf16.msra.mxu0 0
        %479 = vmatpush.bf16.msra.mxu0 0
        %480 = vmatpush.bf16.msra.mxu0 0
        %481 = vmatpush.bf16.msra.mxu0 0
        %482 = vmatpush.bf16.msra.mxu0 0
        %483 = vmatpush.bf16.msra.mxu0 %v470
        %484 = vmatmul.bf16.gmra.mxu0 %v474
        %v485 = vpop.f32.mrf.mxu0
        %v486 = vadd.f32 %v465, %v485
        %v487 = vpop.f32.mrf.mxu0
        %v488 = vadd.f32 %v465, %v487
        %489 = vdwg.mxu0
        %v490 = vmax.f32 %v486, 0.0
        %v491 = vmax.f32 %v488, 0.0
        %494 = vrot.lane.b32.xlu0 %v408, 96
        %v495 = vpop.permute.xlu0 %494
        %496 = vrot.lane.b32.xlu0 %v409, 96
        %v497 = vpop.permute.xlu0 %496
        %v500 = vmax.f32 %v408, %v495
        %v501 = vmax.f32 %v409, %v497
        %504 = vrot.lane.b32.xlu0 %v500, 64
        %v505 = vpop.permute.xlu0 %504
        %506 = vrot.lane.b32.xlu0 %v501, 64
        %v507 = vpop.permute.xlu0 %506
        %v510 = vmax.f32 %v500, %v505
        %v511 = vmax.f32 %v501, %v507
        %v512 = vpack.c.bf16 %v491, %v490
        %v513 = vld [vmem:[%s4] sm:$0xf]
        %v514 = vld [vmem:[%s4 + $0x4] sm:$0xf]
        %v515 = vld [vmem:[%s4 + $0x8] sm:$0xf]
        %v516 = vld [vmem:[%s4 + $0xc] sm:$0xf]
        %v517 = vpack.c.bf16 %v511, %v510
        %v518 = vld [vmem:[%s5] sm:$0xf]
        %v519 = vld [vmem:[%s5 + $0x4] sm:$0xf]
        %v520 = vld [vmem:[%s5 + $0x8] sm:$0xf]
        %v521 = vld [vmem:[%s5 + $0xc] sm:$0xf]
        %v526 = vunpack.c.l.b16 %v518
        %v527 = vunpack.c.l.b16 %v519
        %v528 = vunpack.c.l.b16 %v520
        %v529 = vunpack.c.l.b16 %v521
        %v530 = vpack.c.b16 %v527, %v526
        %v531 = vpack.c.b16 %v529, %v528
        %v535 = vsel %vm431, %v517, 0
        %537 = vmatpush.bf16.msra.mxu0 0
        %538 = vmatpush.bf16.msra.mxu0 0
        %539 = vmatpush.bf16.msra.mxu0 0
        %540 = vmatpush.bf16.msra.mxu0 0
        %541 = vmatpush.bf16.msra.mxu0 0
        %542 = vmatpush.bf16.msra.mxu0 0
        %543 = vmatpush.bf16.msra.mxu0 %v531
        %544 = vmatpush.bf16.msra.mxu0 %v530
        %545 = vmatmul.bf16.gmra.mxu0 %v535
        %v546 = vpop.f32.mrf.mxu0
        %v547 = vadd.f32 0.0, %v546
        %v548 = vpop.f32.mrf.mxu0
        %v549 = vadd.f32 0.0, %v548
        %550 = vdwg.mxu0
        %v555 = vunpack.c.l.b16 %v513
        %v556 = vunpack.c.l.b16 %v514
        %v557 = vunpack.c.l.b16 %v515
        %v558 = vunpack.c.l.b16 %v516
        %v559 = vpack.c.b16 %v556, %v555
        %v560 = vpack.c.b16 %v558, %v557
        %v564 = vsel %vm431, %v512, 0
        %566 = vmatpush.bf16.msra.mxu0 0
        %567 = vmatpush.bf16.msra.mxu0 0
        %568 = vmatpush.bf16.msra.mxu0 0
        %569 = vmatpush.bf16.msra.mxu0 0
        %570 = vmatpush.bf16.msra.mxu0 0
        %571 = vmatpush.bf16.msra.mxu0 0
        %572 = vmatpush.bf16.msra.mxu0 %v560
        %573 = vmatpush.bf16.msra.mxu0 %v559
        %574 = vmatmul.bf16.gmra.mxu0 %v564
        %v575 = vpop.f32.mrf.mxu0
        %v576 = vadd.f32 %v547, %v575
        %v577 = vpop.f32.mrf.mxu0
        %v578 = vadd.f32 %v549, %v577
        %579 = vdwg.mxu0
        %v580 = vld [vmem:[%s6 + $0x5] sm:$0x1]
        %v581 = vperm.slane %v580, 0
        %v582 = vadd.f32 %v576, %v581
        %v583 = vadd.f32 %v578, %v581
        %v584 = vmax.f32 %v582, 0.0
        %v585 = vmax.f32 %v583, 0.0
        %586 = vst.msk [vmem:[%s307] sm:$0xff] %vm431, %v584
        %587 = vst.msk [vmem:[%s307 + $0x8] sm:$0xff] %vm431, %v585
        %s588 = smul.u32 2, %s23
        %p589 = scmp.lt.s32.totalorder %s588, 3
        %s590 = scalar_select %p589, %s588, 3
        %s591 = smul.addr %s590, 8
        %s592 = scalar_lea.vmem %s7, %s591
        %s593 = sand.u32 %s209, 1
        %s594 = scalar_lea.sflag [#allocation3], %s593
        %s595 = sand.u32 %s209, 1
        %s596 = smul.addr %s595, 16
        %s597 = scalar_lea.vmem [#allocation2], %s596
        // Predicated region
        $region49: #{stem_block_forward.1} parent=47 // pred_check
          %p598 = pneg %p193
        $region50: #{stem_block_forward.1} parent=47 // pred_check_branch
          %600 = sbr.rel (%p598) target = $region52
        $region51: #{stem_block_forward.1} parent=47 // pred_region
          %s601 = smul.u32 2, %s23
        $region52: #{stem_block_forward.1} parent=47 // pred_fallthru
          _
        // Predicated region
        $region53: #{stem_block_forward.1} parent=47 // pred_check
          %p602 = pneg %p219
        $region54: #{stem_block_forward.1} parent=47 // pred_check_branch
          %604 = sbr.rel (%p602) target = $region56
        $region55: #{stem_block_forward.1} parent=47 // pred_region
          %s605 = smul.u32 2, %s23
          %607 = vsyncadd %s594, 0
          %s608 = smul.addr %s605, 8
          %s609 = scalar_lea.hbm %s8, %s608
          %s610 = sshll.u32 %s597, 4
          %s611 = int_to_ptr.vmem [resolvable:$true] %s610
          %s612 = sshll.u32 %s609, 4
          %s613 = int_to_ptr.hbm [resolvable:$true] %s612
          %618 = dma.vmem_to_hbm [thread:$0]  %s611, 256, %s613, %s594, 128, 128, 8
        $region56: #{stem_block_forward.1} parent=47 // pred_fallthru
          _
      $region48: #{stem_block_forward.1} parent=5 // pred_fallthru
        _
      %p619 = scmp.le.s32.totalorder 2, %s18
      // Predicated region
      $region57: #{stem_block_forward.1} parent=5 // pred_check
        %p620 = pneg %p619
      $region58: #{stem_block_forward.1} parent=5 // pred_check_branch
        %622 = sbr.rel (%p620) target = $region60
      $region59: #{stem_block_forward.1} parent=5 // pred_region
        %s623 = ssub.s32 %s18, 2
        // Predicated region
        $region61: #{stem_block_forward.1} parent=59 // pred_check
          %p624 = pneg %p199
        $region62: #{stem_block_forward.1} parent=59 // pred_check_branch
          %626 = sbr.rel (%p624) target = $region64
        $region63: #{stem_block_forward.1} parent=59 // pred_region
          %s627 = smul.u32 2, %s24
          %p628 = scmp.lt.s32.totalorder %s627, 3
          %s629 = scalar_select %p628, %s627, 3
          %s630 = smul.addr %s629, 8
          %s631 = scalar_lea.vmem %s7, %s630
        $region64: #{stem_block_forward.1} parent=59 // pred_fallthru
          _
        // Predicated region
        $region65: #{stem_block_forward.1} parent=59 // pred_check
          %p632 = pneg %p225
        $region66: #{stem_block_forward.1} parent=59 // pred_check_branch
          %634 = sbr.rel (%p632) target = $region68
        $region67: #{stem_block_forward.1} parent=59 // pred_region
          %s635 = sand.u32 %s210, 1
          %s636 = scalar_lea.sflag [#allocation3], %s635
          %s637 = sand.u32 %s210, 1
          %s638 = smul.addr %s637, 16
          %s639 = scalar_lea.vmem [#allocation2], %s638
          %641 = dma.done %s636, 256
        $region68: #{stem_block_forward.1} parent=59 // pred_fallthru
          _
      $region60: #{stem_block_forward.1} parent=5 // pred_fallthru
        _
    $region6: #{stem_block_forward.1} parent=1 // loop_footer
      %s22 = sadd.s32 1, %s18
    $region7: #{stem_block_forward.1} parent=1 // loop_footer_branch
      %17 = sbr.rel target = $region3
    $region8: #{stem_block_forward.1} parent=1 // loop_exit
      _
    %642 = vsyncpa [#allocation3], 1
    %s643 = scalar_lea.sflag [#allocation3], 1
    %644 = vsyncpa %s643, 1

</llo_original>
